<compile_context>
chip_gen: v5e
topology: v5e:2x2
jax: 0.10.0
libtpu: 0.0.40
codegen_flags: <defaults>
</compile_context>

<pallas_src>
import math

import jax
import jax.numpy as jnp
from jax.experimental import pallas as pl
from jax.experimental.pallas import tpu as pltpu


def _round_up(x, m):
    return (x + m - 1) // m * m


def _vmem_capacity_bytes():
    """Physical per-core VMEM; conservative (v7x) fallback if query fails."""
    try:
        info = pltpu.get_tpu_info()
        cap = getattr(info, "vmem_capacity_bytes", None)
        if cap:
            return int(cap)
    except Exception:
        pass
    return 64 * 1024 * 1024


def time_embedding_kernel(t_ref, freq_ref, w1_ref, b1_ref, w2_ref, b2_ref, out_ref):
    """Per batch tile: sinusoid(t) -> Linear -> Swish -> Linear (all fused)."""
    # Sinusoidal features computed on the fly (EUP sin/cos) -- no table gather.
    t_col = t_ref[...].astype(jnp.float32)               # (tm, 1)
    arg = t_col * freq_ref[...]                           # (tm, Dh_pad), broadcast
    # Blocked [sin | cos] layout; w1 rows were permuted in the wrapper to match.
    emb = jnp.concatenate([jnp.sin(arg), jnp.cos(arg)], axis=-1)   # (tm, D_pad) f32

    w_dtype = w1_ref.dtype
    # Linear -> Swish -> Linear: bf16 (or f32) MXU operands, f32 accumulation,
    # f32 elementwise math.
    h = jnp.dot(emb.astype(w_dtype), w1_ref[...],
                preferred_element_type=jnp.float32) + b1_ref[...]
    h = h * jax.nn.sigmoid(h)                              # Swish in f32
    out = jnp.dot(h.astype(w_dtype), w2_ref[...],
                  preferred_element_type=jnp.float32) + b2_ref[...]
    out_ref[...] = out.astype(out_ref.dtype)


def xavier_uniform(key, fan_in, fan_out):
    bound = math.sqrt(6.0 / (fan_in + fan_out))
    # (fan_in, fan_out) layout so forward is x @ W directly.
    return jax.random.uniform(key, (fan_in, fan_out), jnp.float32, -bound, bound)


def init_time_embedding(key, d_model, dim):
    """Raw (unpadded) parameters, matching the PyTorch module's initialize()."""
    k1, k2 = jax.random.split(key)
    w1 = xavier_uniform(k1, d_model, dim)          # nn.Linear(d_model, dim), xavier
    b1 = jnp.zeros((dim,), jnp.float32)            # init.zeros_
    w2 = xavier_uniform(k2, dim, dim)              # nn.Linear(dim, dim), xavier
    b2 = jnp.zeros((dim,), jnp.float32)
    return w1, b1, w2, b2


def pack_time_embedding_params(d_model, dim, w1, b1, w2, b2, *,
                               compute_dtype=jnp.bfloat16):
    """One-time padding / reordering (hoisted out of the per-call forward path)."""
    assert d_model % 2 == 0
    d_half = d_model // 2
    Dh_pad = _round_up(d_half, 128)
    D_pad = 2 * Dh_pad
    H_pad = _round_up(dim, 128)

    # Frequency row identical to the PyTorch table construction:
    #   exp(-(arange(0, d_model, 2) / d_model) * log(10000))
    freq = jnp.exp(-(jnp.arange(0, d_model, 2, dtype=jnp.float32) / d_model)
                   * math.log(10000.0))
    freq_p = jnp.zeros((1, Dh_pad), jnp.float32).at[0, :d_half].set(freq)

    # Reorder w1's input rows from interleaved [sin0,cos0,...] (PyTorch table
    # layout) to blocked [sin... | cos...] to match the kernel's feature layout.
    # Padded rows are zero, so padded sin/cos columns contribute nothing.
    w1c = w1.astype(compute_dtype)
    w1_p = jnp.zeros((D_pad, H_pad), compute_dtype)
    w1_p = w1_p.at[:d_half, :dim].set(w1c[0::2])
    w1_p = w1_p.at[Dh_pad:Dh_pad + d_half, :dim].set(w1c[1::2])

    w2_p = jnp.zeros((H_pad, H_pad), compute_dtype).at[:dim, :dim].set(
        w2.astype(compute_dtype))
    b1_p = jnp.zeros((1, H_pad), jnp.float32).at[0, :dim].set(b1.astype(jnp.float32))
    b2_p = jnp.zeros((1, H_pad), jnp.float32).at[0, :dim].set(b2.astype(jnp.float32))

    return dict(freq=freq_p, w1=w1_p, b1=b1_p, w2=w2_p, b2=b2_p,
                d_model=d_model, dim=dim,
                Dh_pad=Dh_pad, D_pad=D_pad, H_pad=H_pad,
                compute_dtype=compute_dtype)


def time_embedding_forward(t, params, *, block_b=256, out_dtype=jnp.float32,
                           trim_output=True):
    """out[b] = swish(sinusoid(t[b]) @ w1 + b1) @ w2 + b2, fused in one kernel."""
    freq_p = params["freq"]
    w1_p, b1_p = params["w1"], params["b1"]
    w2_p, b2_p = params["w2"], params["b2"]
    dim = params["dim"]
    Dh_pad, D_pad, H_pad = params["Dh_pad"], params["D_pad"], params["H_pad"]
    itemsize = jnp.dtype(params["compute_dtype"]).itemsize
    out_itemsize = jnp.dtype(out_dtype).itemsize

    B = t.shape[0]
    B_pad = _round_up(B, 8)

    # Batch tile: multiple of 8 sublanes, <= block_b.  Split into >= 2 tiles when
    # the batch is large enough so both v7x TensorCores get work ("parallel" axis).
    tm = min(_round_up(block_b, 8), B_pad)
    if B_pad >= 256 and B_pad // tm < 2:
        tm = _round_up((B_pad + 1) // 2, 8)
    B_pad = _round_up(B_pad, tm)
    n_tiles = B_pad // tm

    t_p = jnp.zeros((B_pad, 1), jnp.int32).at[:B, 0].set(t.astype(jnp.int32))

    # Cost estimate (two real Linears + sin/cos/sigmoid transcendentals).
    flops = 2 * B_pad * (D_pad * H_pad + H_pad * H_pad)
    transcendentals = B_pad * (D_pad + H_pad)
    bytes_accessed = (t_p.size * 4 + freq_p.size * 4
                      + (w1_p.size + w2_p.size) * itemsize
                      + (b1_p.size + b2_p.size) * 4
                      + B_pad * H_pad * out_itemsize)
    cost = pl.CostEstimate(flops=int(flops), transcendentals=int(transcendentals),
                           bytes_accessed=int(bytes_accessed))

    # VMEM budget: Pallas double-buffers every input/output block; add in-kernel
    # temporaries (emb/h and their casts) plus slack, cap at 75% of physical VMEM.
    resident = 2 * (freq_p.size * 4
                    + (w1_p.size + w2_p.size) * itemsize
                    + (b1_p.size + b2_p.size) * 4)
    tiles = 2 * (tm * 1 * 4 + tm * H_pad * out_itemsize)
    temps = tm * (3 * D_pad + 4 * H_pad) * 4
    need = resident + tiles + temps + (4 << 20)
    cap = int(0.75 * _vmem_capacity_bytes())
    vmem_limit = int(min(cap, max(32 << 20, 2 * need)))

    grid_spec = pltpu.PrefetchScalarGridSpec(
        num_scalar_prefetch=0,
        grid=(n_tiles,),
        in_specs=[
            pl.BlockSpec((tm, 1), lambda i: (i, 0)),          # timestep indices (tiled)
            pl.BlockSpec((1, Dh_pad), lambda i: (0, 0)),      # frequency row (resident)
            pl.BlockSpec((D_pad, H_pad), lambda i: (0, 0)),   # w1 (resident, blocked rows)
            pl.BlockSpec((1, H_pad), lambda i: (0, 0)),       # b1
            pl.BlockSpec((H_pad, H_pad), lambda i: (0, 0)),   # w2 (resident)
            pl.BlockSpec((1, H_pad), lambda i: (0, 0)),       # b2
        ],
        out_specs=pl.BlockSpec((tm, H_pad), lambda i: (i, 0)),
    )

    out_p = pl.pallas_call(
        time_embedding_kernel,
        out_shape=jax.ShapeDtypeStruct((B_pad, H_pad), out_dtype),
        grid_spec=grid_spec,
        compiler_params=pltpu.CompilerParams(
            dimension_semantics=("parallel",),
            vmem_limit_bytes=vmem_limit),
        cost_estimate=cost,
    )(t_p, freq_p, w1_p, b1_p, w2_p, b2_p)

    if trim_output:
        return out_p[:B, :dim]
    return out_p   # lane-dense padded output for consumers that can take it


def make_sinusoidal_table(T, d_model):
    """Matches the PyTorch TimeEmbedding.__init__ table exactly (for reference)."""
    assert d_model % 2 == 0
    emb = jnp.arange(0, d_model, 2, dtype=jnp.float32) / d_model * math.log(10000.0)
    emb = jnp.exp(-emb)
    pos = jnp.arange(T, dtype=jnp.float32)
    emb = pos[:, None] * emb[None, :]
    emb = jnp.stack([jnp.sin(emb), jnp.cos(emb)], axis=-1)
    return emb.reshape(T, d_model)


def reference_forward(t, emb_table, w1, b1, w2, b2):
    emb = jnp.take(emb_table, t, axis=0)
    h = emb @ w1 + b1
    h = h * jax.nn.sigmoid(h)
    return h @ w2 + b2


if __name__ == "__main__":
    # Small shapes consistent with the module: T timesteps, d_model even, hidden dim.
    T, d_model, dim, B = 16, 32, 64, 8

    key = jax.random.PRNGKey(0)
    k_t, k_params = jax.random.split(key)

    t = jax.random.randint(k_t, (B,), 0, T, dtype=jnp.int32)

    w1, b1, w2, b2 = init_time_embedding(k_params, d_model, dim)
    emb_table = make_sinusoidal_table(T, d_model)     # nn.Embedding.from_pretrained
    ref = reference_forward(t, emb_table, w1, b1, w2, b2)

    # f32 verification path (tight tolerance).
    params_f32 = pack_time_embedding_params(d_model, dim, w1, b1, w2, b2,
                                            compute_dtype=jnp.float32)
    out = time_embedding_forward(t, params_f32, out_dtype=jnp.float32)
    out = jax.block_until_ready(out)
    assert out.shape == (B, dim)
    assert jnp.allclose(out, ref, atol=1e-4, rtol=1e-4)

    # bf16-operand / f32-accumulate production path (looser tolerance).
    params_bf16 = pack_time_embedding_params(d_model, dim, w1, b1, w2, b2,
                                             compute_dtype=jnp.bfloat16)
    out_bf16 = time_embedding_forward(t, params_bf16, out_dtype=jnp.float32)
    out_bf16 = jax.block_until_ready(out_bf16)
    assert out_bf16.shape == (B, dim)
    assert jnp.allclose(out_bf16, ref, atol=2e-2, rtol=2e-2)

    print("KERNEL_OK")
</pallas_src>

<mosaic_0001>
module attributes {stable_mosaic.version = 11 : i64} {
  func.func @time_embedding_kernel(%arg0: i32, %arg1: memref<8x1xi32, #tpu.memory_space<vmem>>, %arg2: memref<1x128xf32, #tpu.memory_space<vmem>>, %arg3: memref<256x128xf32, #tpu.memory_space<vmem>>, %arg4: memref<1x128xf32, #tpu.memory_space<vmem>>, %arg5: memref<128x128xf32, #tpu.memory_space<vmem>>, %arg6: memref<1x128xf32, #tpu.memory_space<vmem>>, %arg7: memref<8x128xf32, #tpu.memory_space<vmem>>) attributes {dimension_semantics = [#tpu.dimension_semantics<parallel>], iteration_bounds = array<i64: 1>, scalar_prefetch = 0 : i64, scratch_operands = 0 : i64, tpu.core_type = #tpu.core_type<tc>, window_params = [{transform_indices = @transform_0, window_bounds = array<i64: 8, 1>}, {pipeline_mode = #tpu.pipeline_mode<synchronous>, transform_indices = @transform_1, window_bounds = array<i64: 1, 128>}, {pipeline_mode = #tpu.pipeline_mode<synchronous>, transform_indices = @transform_2, window_bounds = array<i64: 256, 128>}, {pipeline_mode = #tpu.pipeline_mode<synchronous>, transform_indices = @transform_3, window_bounds = array<i64: 1, 128>}, {pipeline_mode = #tpu.pipeline_mode<synchronous>, transform_indices = @transform_4, window_bounds = array<i64: 128, 128>}, {pipeline_mode = #tpu.pipeline_mode<synchronous>, transform_indices = @transform_5, window_bounds = array<i64: 1, 128>}, {transform_indices = @transform_6, window_bounds = array<i64: 8, 128>}]} {
    %c0 = arith.constant 0 : index
    %c0_0 = arith.constant 0 : index
    %0 = vector.load %arg1[%c0, %c0_0] : memref<8x1xi32, #tpu.memory_space<vmem>>, vector<8x1xi32>
    %1 = arith.sitofp %0 : vector<8x1xi32> to vector<8x1xf32>
    %c0_1 = arith.constant 0 : index
    %c0_2 = arith.constant 0 : index
    %2 = vector.load %arg2[%c0_1, %c0_2] : memref<1x128xf32, #tpu.memory_space<vmem>>, vector<1x128xf32>
    %3 = vector.broadcast %1 : vector<8x1xf32> to vector<8x128xf32>
    %4 = vector.broadcast %2 : vector<1x128xf32> to vector<8x128xf32>
    %5 = arith.mulf %3, %4 : vector<8x128xf32>
    %6 = math.sin %5 : vector<8x128xf32>
    %7 = math.cos %5 : vector<8x128xf32>
    %8 = tpu.concatenate %6, %7 in 1 : vector<8x128xf32>, vector<8x128xf32> -> vector<8x256xf32>
    %c0_3 = arith.constant 0 : index
    %c0_4 = arith.constant 0 : index
    %9 = vector.load %arg3[%c0_3, %c0_4] : memref<256x128xf32, #tpu.memory_space<vmem>>, vector<256x128xf32>
    %cst = arith.constant dense<0.000000e+00> : vector<8x128xf32>
    %10 = tpu.matmul %8, %9, %cst {dimension_numbers = #tpu.dot_dimension_numbers<[1], [0], [0], [1], [0, 0, 1, 1], [], []>} : vector<8x256xf32>, vector<256x128xf32>, vector<8x128xf32> -> vector<8x128xf32>
    %c0_5 = arith.constant 0 : index
    %c0_6 = arith.constant 0 : index
    %11 = vector.load %arg4[%c0_5, %c0_6] : memref<1x128xf32, #tpu.memory_space<vmem>>, vector<1x128xf32>
    %12 = vector.broadcast %11 : vector<1x128xf32> to vector<8x128xf32>
    %13 = arith.addf %10, %12 : vector<8x128xf32>
    %14 = arith.negf %13 : vector<8x128xf32>
    %15 = math.exp %14 : vector<8x128xf32>
    %cst_7 = arith.constant 1.000000e+00 : f32
    %16 = vector.broadcast %cst_7 : f32 to vector<8x128xf32>
    %17 = arith.addf %16, %15 : vector<8x128xf32>
    %18 = arith.divf %16, %17 : vector<8x128xf32>
    %19 = arith.mulf %13, %18 : vector<8x128xf32>
    %c0_8 = arith.constant 0 : index
    %c0_9 = arith.constant 0 : index
    %20 = vector.load %arg5[%c0_8, %c0_9] : memref<128x128xf32, #tpu.memory_space<vmem>>, vector<128x128xf32>
    %cst_10 = arith.constant dense<0.000000e+00> : vector<8x128xf32>
    %21 = tpu.matmul %19, %20, %cst_10 {dimension_numbers = #tpu.dot_dimension_numbers<[1], [0], [0], [1], [0, 0, 1, 1], [], []>} : vector<8x128xf32>, vector<128x128xf32>, vector<8x128xf32> -> vector<8x128xf32>
    %c0_11 = arith.constant 0 : index
    %c0_12 = arith.constant 0 : index
    %22 = vector.load %arg6[%c0_11, %c0_12] : memref<1x128xf32, #tpu.memory_space<vmem>>, vector<1x128xf32>
    %23 = vector.broadcast %22 : vector<1x128xf32> to vector<8x128xf32>
    %24 = arith.addf %21, %23 : vector<8x128xf32>
    %c0_13 = arith.constant 0 : index
    %c0_14 = arith.constant 0 : index
    %25 = vector.load %arg7[%c0_13, %c0_14] : memref<8x128xf32, #tpu.memory_space<vmem>>, vector<8x128xf32>
    tpu.vector_store %arg7[%c0_13, %c0_14], %24 {strides = array<i32>} : memref<8x128xf32, #tpu.memory_space<vmem>>, vector<8x128xf32>,
    return
  }
  func.func @transform_0(%arg0: i32) -> (i32, i32) {
    %c0_i32 = arith.constant 0 : i32
    %c0_i32_0 = arith.constant 0 : i32
    return %arg0, %c0_i32 : i32, i32
  }
  func.func @transform_1(%arg0: i32) -> (i32, i32) {
    %c0_i32 = arith.constant 0 : i32
    %c0_i32_0 = arith.constant 0 : i32
    %c0_i32_1 = arith.constant 0 : i32
    return %c0_i32, %c0_i32_0 : i32, i32
  }
  func.func @transform_2(%arg0: i32) -> (i32, i32) {
    %c0_i32 = arith.constant 0 : i32
    %c0_i32_0 = arith.constant 0 : i32
    %c0_i32_1 = arith.constant 0 : i32
    return %c0_i32, %c0_i32_0 : i32, i32
  }
  func.func @transform_3(%arg0: i32) -> (i32, i32) {
    %c0_i32 = arith.constant 0 : i32
    %c0_i32_0 = arith.constant 0 : i32
    %c0_i32_1 = arith.constant 0 : i32
    return %c0_i32, %c0_i32_0 : i32, i32
  }
  func.func @transform_4(%arg0: i32) -> (i32, i32) {
    %c0_i32 = arith.constant 0 : i32
    %c0_i32_0 = arith.constant 0 : i32
    %c0_i32_1 = arith.constant 0 : i32
    return %c0_i32, %c0_i32_0 : i32, i32
  }
  func.func @transform_5(%arg0: i32) -> (i32, i32) {
    %c0_i32 = arith.constant 0 : i32
    %c0_i32_0 = arith.constant 0 : i32
    %c0_i32_1 = arith.constant 0 : i32
    return %c0_i32, %c0_i32_0 : i32, i32
  }
  func.func @transform_6(%arg0: i32) -> (i32, i32) {
    %c0_i32 = arith.constant 0 : i32
    %c0_i32_0 = arith.constant 0 : i32
    return %arg0, %c0_i32 : i32, i32
  }
}

</mosaic_0001>

<llo_original>
// kernel: tpu_custom_call.1
$region0: #{tpu_custom_call.1}
  #allocation0 [shape = 'u32[]', space=smem, size = 0x4, offset = 0x4, fixed_abs, tag = 'smem constant byte address 0x4 - core index']
  #allocation1 [shape = 'u32[72,128]{1,0:T(1,128)}', space=vmem, size = 0x9000, scoped, tag = 'internal scratch']
  %s0 = inlined_call_operand.vmem [shape: s32[8,1], index: 0, kind: input, shape index: {}]
  %s1 = inlined_call_operand.vmem [shape: f32[1,128], index: 1, kind: input, shape index: {}]
  %s2 = inlined_call_operand.hbm [shape: f32[256,128], index: 2, kind: input, shape index: {}]
  %s3 = inlined_call_operand.vmem [shape: f32[1,128], index: 3, kind: input, shape index: {}]
  %s4 = inlined_call_operand.hbm [shape: f32[128,128], index: 4, kind: input, shape index: {}]
  %s5 = inlined_call_operand.vmem [shape: f32[1,128], index: 5, kind: input, shape index: {}]
  %s6 = inlined_call_operand.hbm [shape: f32[8,128], index: 6, kind: output, shape index: {}]
  %s7 = sld [smem:[#allocation0]]
  $region42: #{tpu_custom_call.1} parent=0
    _
  %s9 = ssub.s32 1, %s7
  %s10 = scalar_select 0, %s9, %s7
  $region1: #{tpu_custom_call.1} parent=0
    #allocation2 [shape = 'u8[131072]{0}', space=vmem, size = 0x20000, scoped, tag = 'input window, operand 2, single buffered']
    #allocation3 [shape = 's32[1]{0}', space=sflag, size = 0x4, scoped, tag = 'scoped memory for tpu_custom_call.1']
    #allocation4 [shape = 's32[1]{0}', space=sflag, size = 0x4, scoped, tag = 'scoped memory for tpu_custom_call.1']
    #allocation5 [shape = 'u8[65536]{0}', space=vmem, size = 0x10000, scoped, tag = 'input window, operand 4, single buffered']
    #allocation6 [shape = 's32[1]{0}', space=sflag, size = 0x4, scoped, tag = 'scoped memory for tpu_custom_call.1']
    #allocation7 [shape = 'u8[4096]{0}', space=vmem, size = 0x1000, scoped, tag = 'output window, operand 0, single buffered']
    %11 = vsyncpa [#allocation3], 0
    %12 = vsyncpa [#allocation6], 0
    %13 = vsyncpa [#allocation4], 0
    // Predicated region
    $region2: #{tpu_custom_call.1} parent=1 // pred_check
      _
    $region3: #{tpu_custom_call.1} parent=1 // pred_check_branch
      %15 = sbr.rel (0) target = $region5
    $region4: #{tpu_custom_call.1} parent=1 // pred_region
      _
    $region5: #{tpu_custom_call.1} parent=1 // pred_fallthru
      _
    // Predicated region
    $region6: #{tpu_custom_call.1} parent=1 // pred_check
      _
    $region7: #{tpu_custom_call.1} parent=1 // pred_check_branch
      %17 = sbr.rel (0) target = $region9
    $region8: #{tpu_custom_call.1} parent=1 // pred_region
      _
    $region9: #{tpu_custom_call.1} parent=1 // pred_fallthru
      _
    // Predicated region
    $region10: #{tpu_custom_call.1} parent=1 // pred_check
      _
    $region11: #{tpu_custom_call.1} parent=1 // pred_check_branch
      %19 = sbr.rel (0) target = $region13
    $region12: #{tpu_custom_call.1} parent=1 // pred_region
      %21 = vsyncadd [#allocation3], 0
      %s22 = sshll.u32 %s2, 4
      %s23 = int_to_ptr.hbm [resolvable:$true] %s22
      %s24 = sshll.u32 [#allocation2], 4
      %s25 = int_to_ptr.vmem [resolvable:$true] %s24
      %30 = dma.hbm_to_vmem [thread:$0]  %s23, 4096, %s25, [#allocation3], 128, 128, 8
    $region13: #{tpu_custom_call.1} parent=1 // pred_fallthru
      _
    // Predicated region
    $region14: #{tpu_custom_call.1} parent=1 // pred_check
      _
    $region15: #{tpu_custom_call.1} parent=1 // pred_check_branch
      %32 = sbr.rel (0) target = $region17
    $region16: #{tpu_custom_call.1} parent=1 // pred_region
      _
    $region17: #{tpu_custom_call.1} parent=1 // pred_fallthru
      _
    // Predicated region
    $region18: #{tpu_custom_call.1} parent=1 // pred_check
      _
    $region19: #{tpu_custom_call.1} parent=1 // pred_check_branch
      %34 = sbr.rel (0) target = $region21
    $region20: #{tpu_custom_call.1} parent=1 // pred_region
      %36 = vsyncadd [#allocation6], 0
      %s37 = sshll.u32 %s4, 4
      %s38 = int_to_ptr.hbm [resolvable:$true] %s37
      %s39 = sshll.u32 [#allocation5], 4
      %s40 = int_to_ptr.vmem [resolvable:$true] %s39
      %45 = dma.hbm_to_vmem [thread:$0]  %s38, 2048, %s40, [#allocation6], 128, 128, 8
    $region21: #{tpu_custom_call.1} parent=1 // pred_fallthru
      _
    // Predicated region
    $region22: #{tpu_custom_call.1} parent=1 // pred_check
      _
    $region23: #{tpu_custom_call.1} parent=1 // pred_check_branch
      %47 = sbr.rel (0) target = $region25
    $region24: #{tpu_custom_call.1} parent=1 // pred_region
      _
    $region25: #{tpu_custom_call.1} parent=1 // pred_fallthru
      _
    // Predicated region
    $region26: #{tpu_custom_call.1} parent=1 // pred_check
      _
    $region27: #{tpu_custom_call.1} parent=1 // pred_check_branch
      %49 = sbr.rel (0) target = $region29
    $region28: #{tpu_custom_call.1} parent=1 // pred_region
      %51 = dma.done [#allocation3], 4096
    $region29: #{tpu_custom_call.1} parent=1 // pred_fallthru
      _
    // Predicated region
    $region30: #{tpu_custom_call.1} parent=1 // pred_check
      _
    $region31: #{tpu_custom_call.1} parent=1 // pred_check_branch
      %53 = sbr.rel (0) target = $region33
    $region32: #{tpu_custom_call.1} parent=1 // pred_region
      %55 = dma.done [#allocation6], 2048
    $region33: #{tpu_custom_call.1} parent=1 // pred_fallthru
      _
    %v56 = vld [vmem:[%s0] sm:$0xff]
    %v57 = vcvt.s32.f32 %v56
    %v58 = vld [vmem:[%s1] sm:$0x1]
    %60 = vset.pattern.permute.xlu0 0
    %61 = vperm.xlu0 %60, %v57
    %v62 = vpop.permute.xlu0 %61
    %v65 = vperm.slane %v58, 0
    %v67 = vmul.f32 %v62, %v65
    %v68 = vand.u32 2147483647, %v67
    %vm69 = vcmp.le.f32.partialorder %v68, 0.7853982
    %vm70 = vcmp.lt.s32.totalorder %v67, 0
    %v71 = vand.u32 %v67, 2139095040
    %v72 = vshrl.u32 %v71, 23
    %v73 = vsub.s32 %v72, 127
    %v74 = vand.u32 2147483647, %v67
    %v75 = vand.u32 %v74, 8388607
    %v76 = vor.u32 %v75, 8388608
    %v77 = vsub.s32 0, %v76
    %v78 = vadd.s32 %v73, 1
    %vm79 = vcmp.gt.s32.totalorder %v78, 0
    %v80 = vsel %vm79, %v78, 0
    %v81 = vshrl.u32 %v80, 5
    %v82 = vand.u32 %v80, 31
    %v83 = vsub.s32 32, %v82
    %v84 = vshrl.u32 683565275, %v83
    %v85 = vshll.u32 683565275, %v82
    %v86 = vshrl.u32 2475754826, %v83
    %v87 = vor.u32 %v85, %v86
    %v88 = vshll.u32 2475754826, %v82
    %v89 = vshrl.u32 2131351028, %v83
    %v90 = vor.u32 %v88, %v89
    %v91 = vshll.u32 2131351028, %v82
    %v92 = vshrl.u32 2102212464, %v83
    %v93 = vor.u32 %v91, %v92
    %v94 = vshll.u32 2102212464, %v82
    %v95 = vshrl.u32 920167782, %v83
    %v96 = vor.u32 %v94, %v95
    %v97 = vshll.u32 920167782, %v82
    %v98 = vshrl.u32 1326507024, %v83
    %v99 = vor.u32 %v97, %v98
    %vm100 = vcmp.lt.s32.totalorder %v81, 1
    %vm101 = vcmp.lt.s32.totalorder %v81, 2
    %vm102 = vcmp.lt.s32.totalorder %v81, 3
    %vm103 = vcmp.lt.s32.totalorder %v81, 4
    %v104 = vsel %vm100, %v84, %v87
    %v105 = vsel %vm103, %v93, 2102212464
    %v106 = vsel %vm102, %v90, %v105
    %v107 = vsel %vm101, %v104, %v106
    %v108 = vsel %vm100, %v87, %v90
    %v109 = vsel %vm103, %v96, 920167782
    %v110 = vsel %vm102, %v93, %v109
    %v111 = vsel %vm101, %v108, %v110
    %v112 = vsel %vm100, %v90, %v93
    %v113 = vsel %vm103, %v99, 1326507024
    %v114 = vsel %vm102, %v96, %v113
    %v115 = vsel %vm101, %v112, %v114
    %v116 = vshll.u32 %v76, 8
    %v117 = vand.u32 %v116, 65535
    %v118 = vshrl.u32 %v116, 16
    %v119 = vand.u32 %v115, 65535
    %v120 = vshrl.u32 %v115, 16
    %v121 = vmul.u32 %v117, %v119
    %v122 = vmul.u32 %v117, %v120
    %v123 = vmul.u32 %v118, %v119
    %v124 = vmul.u32 %v118, %v120
    %v125 = vshll.u32 %v122, 16
    %v126 = vshrl.u32 %v122, 16
    %v127 = vshll.u32 %v123, 16
    %v128 = vshrl.u32 %v123, 16
    %vm129 = vc.u32 %v121, %v125
    %v130 = vsel %vm129, 1, 0
    %v131 = vadd.s32 %v121, %v125
    %v132 = vadd.s32 %v124, %v130
    %vm133 = vc.u32 %v131, %v127
    %v134 = vsel %vm133, 1, 0
    %v135 = vadd.s32 %v131, %v127
    %v136 = vadd.s32 %v132, %v134
    %v137 = vadd.s32 %v136, %v126
    %v138 = vadd.s32 %v137, %v128
    %v139 = vand.u32 %v116, 65535
    %v140 = vshrl.u32 %v116, 16
    %v141 = vand.u32 %v111, 65535
    %v142 = vshrl.u32 %v111, 16
    %v143 = vmul.u32 %v139, %v141
    %v144 = vmul.u32 %v139, %v142
    %v145 = vmul.u32 %v140, %v141
    %v146 = vmul.u32 %v140, %v142
    %v147 = vshll.u32 %v144, 16
    %v148 = vshrl.u32 %v144, 16
    %v149 = vshll.u32 %v145, 16
    %v150 = vshrl.u32 %v145, 16
    %vm151 = vc.u32 %v143, %v147
    %v152 = vsel %vm151, 1, 0
    %v153 = vadd.s32 %v143, %v147
    %v154 = vadd.s32 %v146, %v152
    %vm155 = vc.u32 %v153, %v149
    %v156 = vsel %vm155, 1, 0
    %v157 = vadd.s32 %v153, %v149
    %v158 = vadd.s32 %v154, %v156
    %v159 = vadd.s32 %v158, %v148
    %v160 = vadd.s32 %v159, %v150
    %v161 = vmul.u32 %v116, %v107
    %v162 = vadd.s32 %v138, %v157
    %vm163 = vc.u32 %v138, %v157
    %v164 = vadd.s32 %v160, 1
    %v165 = vsel %vm163, %v164, %v160
    %v166 = vadd.s32 %v161, %v165
    %v167 = vadd.s32 %v166, 536870912
    %v168 = vshrl.u32 %v167, 30
    %v169 = vshll.u32 %v168, 30
    %v170 = vsub.s32 %v166, %v169
    %vm171 = vcmp.lt.s32.totalorder %v170, 0
    %v172 = vsub.s32 0, %v170
    %v173 = vsel %vm171, %v172, %v170
    %v174 = vclz %v173
    %v175 = vsub.s32 %v174, 2
    %vm176 = vcmp.gt.s32.totalorder 0, %v175
    %v177 = vsel %vm176, 0, %v175
    %v178 = vsub.s32 32, %v177
    %v179 = vshll.u32 %v170, %v177
    %v180 = vshrl.u32 %v162, %v178
    %v181 = vor.u32 %v179, %v180
    %v182 = vsub.s32 4294967266, %v177
    %v183 = vadd.s32 %v182, 127
    %v184 = vshll.u32 %v183, 23
    %v185 = vor.u32 4788187, %v184
    %v186 = vand.u32 2147483647, %v185
    %v188 = vcvt.s32.f32 %v181
    %v189 = vmul.f32 %v188, %v186
    %v190 = vxor.u32 %v189, 2147483648
    %v191 = vsel %vm70, %v190, %v189
    %v192 = vsub.s32 4, %v168
    %v193 = vsel %vm70, %v192, %v168
    %v194 = vsel %vm69, %v67, %v191
    %v195 = vsel %vm69, 0, %v193
    %v196 = vmul.f32 %v194, %v194
    %v197 = vmul.f32 %v196, -0.001358992
    %v198 = vadd.f32 %v197, 0.041655596
    %v199 = vmul.f32 %v196, %v198
    %v200 = vadd.f32 %v199, -0.4999988
    %v201 = vmul.f32 %v196, %v200
    %v202 = vadd.f32 1.0, %v201
    %v203 = vmul.f32 %v194, %v194
    %v204 = vmul.f32 %v203, -0.00019511016
    %v205 = vadd.f32 %v204, 0.008332121
    %v206 = vmul.f32 %v203, %v205
    %v207 = vadd.f32 %v206, -0.16666654
    %v208 = vmul.f32 %v203, %v207
    %v209 = vadd.f32 %v208, 1.0
    %v210 = vmul.f32 %v209, %v194
    %vm211 = vweird.f32 %v67
    %v212 = vadd.s32 %v195, 3
    %v213 = vand.u32 %v212, 3
    %vm214 = vcmp.lt.s32.totalorder %v213, 2
    %vm215 = vcmp.eq.s32.totalorder %v213, 0
    %v216 = vxor.u32 %v210, 2147483648
    %v217 = vsel %vm215, %v202, %v216
    %vm218 = vcmp.eq.s32.totalorder %v213, 2
    %v219 = vxor.u32 %v202, 2147483648
    %v220 = vsel %vm218, %v219, %v210
    %v221 = vsel %vm214, %v217, %v220
    %v222 = vsel %vm211, nan, %v221
    %v223 = vand.u32 2147483647, %v67
    %vm224 = vcmp.le.f32.partialorder %v223, 0.7853982
    %vm225 = vcmp.lt.s32.totalorder %v67, 0
    %v226 = vand.u32 %v67, 2139095040
    %v227 = vshrl.u32 %v226, 23
    %v228 = vsub.s32 %v227, 127
    %v229 = vand.u32 2147483647, %v67
    %v230 = vand.u32 %v229, 8388607
    %v231 = vor.u32 %v230, 8388608
    %v232 = vsub.s32 0, %v231
    %v233 = vadd.s32 %v228, 1
    %vm234 = vcmp.gt.s32.totalorder %v233, 0
    %v235 = vsel %vm234, %v233, 0
    %v236 = vshrl.u32 %v235, 5
    %v237 = vand.u32 %v235, 31
    %v238 = vsub.s32 32, %v237
    %v239 = vshrl.u32 683565275, %v238
    %v240 = vshll.u32 683565275, %v237
    %v241 = vshrl.u32 2475754826, %v238
    %v242 = vor.u32 %v240, %v241
    %v243 = vshll.u32 2475754826, %v237
    %v244 = vshrl.u32 2131351028, %v238
    %v245 = vor.u32 %v243, %v244
    %v246 = vshll.u32 2131351028, %v237
    %v247 = vshrl.u32 2102212464, %v238
    %v248 = vor.u32 %v246, %v247
    %v249 = vshll.u32 2102212464, %v237
    %v250 = vshrl.u32 920167782, %v238
    %v251 = vor.u32 %v249, %v250
    %v252 = vshll.u32 920167782, %v237
    %v253 = vshrl.u32 1326507024, %v238
    %v254 = vor.u32 %v252, %v253
    %vm255 = vcmp.lt.s32.totalorder %v236, 1
    %vm256 = vcmp.lt.s32.totalorder %v236, 2
    %vm257 = vcmp.lt.s32.totalorder %v236, 3
    %vm258 = vcmp.lt.s32.totalorder %v236, 4
    %v259 = vsel %vm255, %v239, %v242
    %v260 = vsel %vm258, %v248, 2102212464
    %v261 = vsel %vm257, %v245, %v260
    %v262 = vsel %vm256, %v259, %v261
    %v263 = vsel %vm255, %v242, %v245
    %v264 = vsel %vm258, %v251, 920167782
    %v265 = vsel %vm257, %v248, %v264
    %v266 = vsel %vm256, %v263, %v265
    %v267 = vsel %vm255, %v245, %v248
    %v268 = vsel %vm258, %v254, 1326507024
    %v269 = vsel %vm257, %v251, %v268
    %v270 = vsel %vm256, %v267, %v269
    %v271 = vshll.u32 %v231, 8
    %v272 = vand.u32 %v271, 65535
    %v273 = vshrl.u32 %v271, 16
    %v274 = vand.u32 %v270, 65535
    %v275 = vshrl.u32 %v270, 16
    %v276 = vmul.u32 %v272, %v274
    %v277 = vmul.u32 %v272, %v275
    %v278 = vmul.u32 %v273, %v274
    %v279 = vmul.u32 %v273, %v275
    %v280 = vshll.u32 %v277, 16
    %v281 = vshrl.u32 %v277, 16
    %v282 = vshll.u32 %v278, 16
    %v283 = vshrl.u32 %v278, 16
    %vm284 = vc.u32 %v276, %v280
    %v285 = vsel %vm284, 1, 0
    %v286 = vadd.s32 %v276, %v280
    %v287 = vadd.s32 %v279, %v285
    %vm288 = vc.u32 %v286, %v282
    %v289 = vsel %vm288, 1, 0
    %v290 = vadd.s32 %v286, %v282
    %v291 = vadd.s32 %v287, %v289
    %v292 = vadd.s32 %v291, %v281
    %v293 = vadd.s32 %v292, %v283
    %v294 = vand.u32 %v271, 65535
    %v295 = vshrl.u32 %v271, 16
    %v296 = vand.u32 %v266, 65535
    %v297 = vshrl.u32 %v266, 16
    %v298 = vmul.u32 %v294, %v296
    %v299 = vmul.u32 %v294, %v297
    %v300 = vmul.u32 %v295, %v296
    %v301 = vmul.u32 %v295, %v297
    %v302 = vshll.u32 %v299, 16
    %v303 = vshrl.u32 %v299, 16
    %v304 = vshll.u32 %v300, 16
    %v305 = vshrl.u32 %v300, 16
    %vm306 = vc.u32 %v298, %v302
    %v307 = vsel %vm306, 1, 0
    %v308 = vadd.s32 %v298, %v302
    %v309 = vadd.s32 %v301, %v307
    %vm310 = vc.u32 %v308, %v304
    %v311 = vsel %vm310, 1, 0
    %v312 = vadd.s32 %v308, %v304
    %v313 = vadd.s32 %v309, %v311
    %v314 = vadd.s32 %v313, %v303
    %v315 = vadd.s32 %v314, %v305
    %v316 = vmul.u32 %v271, %v262
    %v317 = vadd.s32 %v293, %v312
    %vm318 = vc.u32 %v293, %v312
    %v319 = vadd.s32 %v315, 1
    %v320 = vsel %vm318, %v319, %v315
    %v321 = vadd.s32 %v316, %v320
    %v322 = vadd.s32 %v321, 536870912
    %v323 = vshrl.u32 %v322, 30
    %v324 = vshll.u32 %v323, 30
    %v325 = vsub.s32 %v321, %v324
    %vm326 = vcmp.lt.s32.totalorder %v325, 0
    %v327 = vsub.s32 0, %v325
    %v328 = vsel %vm326, %v327, %v325
    %v329 = vclz %v328
    %v330 = vsub.s32 %v329, 2
    %vm331 = vcmp.gt.s32.totalorder 0, %v330
    %v332 = vsel %vm331, 0, %v330
    %v333 = vsub.s32 32, %v332
    %v334 = vshll.u32 %v325, %v332
    %v335 = vshrl.u32 %v317, %v333
    %v336 = vor.u32 %v334, %v335
    %v337 = vsub.s32 4294967266, %v332
    %v338 = vadd.s32 %v337, 127
    %v339 = vshll.u32 %v338, 23
    %v340 = vor.u32 4788187, %v339
    %v341 = vand.u32 2147483647, %v340
    %v343 = vcvt.s32.f32 %v336
    %v344 = vmul.f32 %v343, %v341
    %v345 = vxor.u32 %v344, 2147483648
    %v346 = vsel %vm225, %v345, %v344
    %v347 = vsub.s32 4, %v323
    %v348 = vsel %vm225, %v347, %v323
    %v349 = vsel %vm224, %v67, %v346
    %v350 = vsel %vm224, 0, %v348
    %v351 = vmul.f32 %v349, %v349
    %v352 = vmul.f32 %v351, -0.001358992
    %v353 = vadd.f32 %v352, 0.041655596
    %v354 = vmul.f32 %v351, %v353
    %v355 = vadd.f32 %v354, -0.4999988
    %v356 = vmul.f32 %v351, %v355
    %v357 = vadd.f32 1.0, %v356
    %v358 = vmul.f32 %v349, %v349
    %v359 = vmul.f32 %v358, -0.00019511016
    %v360 = vadd.f32 %v359, 0.008332121
    %v361 = vmul.f32 %v358, %v360
    %v362 = vadd.f32 %v361, -0.16666654
    %v363 = vmul.f32 %v358, %v362
    %v364 = vadd.f32 %v363, 1.0
    %v365 = vmul.f32 %v364, %v349
    %vm366 = vweird.f32 %v67
    %v367 = vand.u32 %v350, 3
    %vm368 = vcmp.lt.s32.totalorder %v367, 2
    %vm369 = vcmp.eq.s32.totalorder %v367, 0
    %v370 = vxor.u32 %v365, 2147483648
    %v371 = vsel %vm369, %v357, %v370
    %vm372 = vcmp.eq.s32.totalorder %v367, 2
    %v373 = vxor.u32 %v357, 2147483648
    %v374 = vsel %vm372, %v373, %v365
    %v375 = vsel %vm368, %v371, %v374
    %v376 = vsel %vm366, nan, %v375
    %v377 = vld [vmem:[#allocation2] sm:$0xff]
    %v378 = vld [vmem:[#allocation2 + $0x8] sm:$0xff]
    %v379 = vld [vmem:[#allocation2 + $0x10] sm:$0xff]
    %v380 = vld [vmem:[#allocation2 + $0x18] sm:$0xff]
    %v381 = vld [vmem:[#allocation2 + $0x20] sm:$0xff]
    %v382 = vld [vmem:[#allocation2 + $0x28] sm:$0xff]
    %v383 = vld [vmem:[#allocation2 + $0x30] sm:$0xff]
    %v384 = vld [vmem:[#allocation2 + $0x38] sm:$0xff]
    %v385 = vld [vmem:[#allocation2 + $0x40] sm:$0xff]
    %v386 = vld [vmem:[#allocation2 + $0x48] sm:$0xff]
    %v387 = vld [vmem:[#allocation2 + $0x50] sm:$0xff]
    %v388 = vld [vmem:[#allocation2 + $0x58] sm:$0xff]
    %v389 = vld [vmem:[#allocation2 + $0x60] sm:$0xff]
    %v390 = vld [vmem:[#allocation2 + $0x68] sm:$0xff]
    %v391 = vld [vmem:[#allocation2 + $0x70] sm:$0xff]
    %v392 = vld [vmem:[#allocation2 + $0x78] sm:$0xff]
    %v393 = vld [vmem:[#allocation2 + $0x80] sm:$0xff]
    %v394 = vld [vmem:[#allocation2 + $0x88] sm:$0xff]
    %v395 = vld [vmem:[#allocation2 + $0x90] sm:$0xff]
    %v396 = vld [vmem:[#allocation2 + $0x98] sm:$0xff]
    %v397 = vld [vmem:[#allocation2 + $0xa0] sm:$0xff]
    %v398 = vld [vmem:[#allocation2 + $0xa8] sm:$0xff]
    %v399 = vld [vmem:[#allocation2 + $0xb0] sm:$0xff]
    %v400 = vld [vmem:[#allocation2 + $0xb8] sm:$0xff]
    %v401 = vld [vmem:[#allocation2 + $0xc0] sm:$0xff]
    %v402 = vld [vmem:[#allocation2 + $0xc8] sm:$0xff]
    %v403 = vld [vmem:[#allocation2 + $0xd0] sm:$0xff]
    %v404 = vld [vmem:[#allocation2 + $0xd8] sm:$0xff]
    %v405 = vld [vmem:[#allocation2 + $0xe0] sm:$0xff]
    %v406 = vld [vmem:[#allocation2 + $0xe8] sm:$0xff]
    %v407 = vld [vmem:[#allocation2 + $0xf0] sm:$0xff]
    %v408 = vld [vmem:[#allocation2 + $0xf8] sm:$0xff]
    %v409 = vld [vmem:[%s3] sm:$0x1]
    %v411 = vperm.slane %v409, 0
    %413 = vmatpush.msra.mxu0 %v392
    %414 = vmatpush.msra.mxu0 %v391
    %415 = vmatpush.msra.mxu0 %v390
    %416 = vmatpush.msra.mxu0 %v389
    %417 = vmatpush.msra.mxu0 %v388
    %418 = vmatpush.msra.mxu0 %v387
    %419 = vmatpush.msra.mxu0 %v386
    %420 = vmatpush.msra.mxu0 %v385
    %421 = vmatpush.msra.mxu0 %v384
    %422 = vmatpush.msra.mxu0 %v383
    %423 = vmatpush.msra.mxu0 %v382
    %424 = vmatpush.msra.mxu0 %v381
    %425 = vmatpush.msra.mxu0 %v380
    %426 = vmatpush.msra.mxu0 %v379
    %427 = vmatpush.msra.mxu0 %v378
    %428 = vmatpush.msra.mxu0 %v377
    %429 = vmatmul.f32.gmra.mxu0 %v222
    %v430 = vpop.f32.mrf.mxu0
    %v431 = vadd.f32 %v411, %v430
    %432 = vdwg.mxu0
    %433 = vmatpush.msra.mxu0 %v408
    %434 = vmatpush.msra.mxu0 %v407
    %435 = vmatpush.msra.mxu0 %v406
    %436 = vmatpush.msra.mxu0 %v405
    %437 = vmatpush.msra.mxu0 %v404
    %438 = vmatpush.msra.mxu0 %v403
    %439 = vmatpush.msra.mxu0 %v402
    %440 = vmatpush.msra.mxu0 %v401
    %441 = vmatpush.msra.mxu0 %v400
    %442 = vmatpush.msra.mxu0 %v399
    %443 = vmatpush.msra.mxu0 %v398
    %444 = vmatpush.msra.mxu0 %v397
    %445 = vmatpush.msra.mxu0 %v396
    %446 = vmatpush.msra.mxu0 %v395
    %447 = vmatpush.msra.mxu0 %v394
    %448 = vmatpush.msra.mxu0 %v393
    %449 = vmatmul.f32.gmra.mxu0 %v376
    %v450 = vpop.f32.mrf.mxu0
    %v451 = vadd.f32 %v431, %v450
    %452 = vdwg.mxu0
    %v453 = vxor.u32 %v451, 2147483648
    %v454 = vmul.f32 %v453, 1.442695
    %v455 = vpow.pop %v454
    %v456 = vadd.f32 %v455, 1.0
    %v457 = vrcp.pop %v456
    %v458 = vmul.f32 %v456, %v457
    %v459 = vsub.f32 1.0, %v458
    %v460 = vmul.f32 %v457, %v459
    %v461 = vadd.f32 %v457, %v460
    %vm462 = vweird.f32 %v456
    %vm463 = vweird.f32 %v457
    %vm464 = vmor %vm462, %vm463
    %v465 = vsel %vm464, %v457, %v461
    %v466 = vand.u32 2147483647, %v456
    %vm467 = vcmp.eq.f32.partialorder %v466, 8.507059e+37
    %v468 = vand.u32 %v456, 2147483648
    %v469 = vor.u32 1.1754944e-38, %v468
    %v470 = vsel %vm467, %v469, %v465
    %v471 = vmul.f32 1.0, %v470
    %v472 = vmul.f32 %v451, %v471
    %v473 = vld [vmem:[#allocation5] sm:$0xff]
    %v474 = vld [vmem:[#allocation5 + $0x8] sm:$0xff]
    %v475 = vld [vmem:[#allocation5 + $0x10] sm:$0xff]
    %v476 = vld [vmem:[#allocation5 + $0x18] sm:$0xff]
    %v477 = vld [vmem:[#allocation5 + $0x20] sm:$0xff]
    %v478 = vld [vmem:[#allocation5 + $0x28] sm:$0xff]
    %v479 = vld [vmem:[#allocation5 + $0x30] sm:$0xff]
    %v480 = vld [vmem:[#allocation5 + $0x38] sm:$0xff]
    %v481 = vld [vmem:[#allocation5 + $0x40] sm:$0xff]
    %v482 = vld [vmem:[#allocation5 + $0x48] sm:$0xff]
    %v483 = vld [vmem:[#allocation5 + $0x50] sm:$0xff]
    %v484 = vld [vmem:[#allocation5 + $0x58] sm:$0xff]
    %v485 = vld [vmem:[#allocation5 + $0x60] sm:$0xff]
    %v486 = vld [vmem:[#allocation5 + $0x68] sm:$0xff]
    %v487 = vld [vmem:[#allocation5 + $0x70] sm:$0xff]
    %v488 = vld [vmem:[#allocation5 + $0x78] sm:$0xff]
    %v489 = vld [vmem:[%s5] sm:$0x1]
    %v491 = vperm.slane %v489, 0
    %493 = vmatpush.msra.mxu0 %v488
    %494 = vmatpush.msra.mxu0 %v487
    %495 = vmatpush.msra.mxu0 %v486
    %496 = vmatpush.msra.mxu0 %v485
    %497 = vmatpush.msra.mxu0 %v484
    %498 = vmatpush.msra.mxu0 %v483
    %499 = vmatpush.msra.mxu0 %v482
    %500 = vmatpush.msra.mxu0 %v481
    %501 = vmatpush.msra.mxu0 %v480
    %502 = vmatpush.msra.mxu0 %v479
    %503 = vmatpush.msra.mxu0 %v478
    %504 = vmatpush.msra.mxu0 %v477
    %505 = vmatpush.msra.mxu0 %v476
    %506 = vmatpush.msra.mxu0 %v475
    %507 = vmatpush.msra.mxu0 %v474
    %508 = vmatpush.msra.mxu0 %v473
    %509 = vmatmul.f32.gmra.mxu0 %v472
    %v510 = vpop.f32.mrf.mxu0
    %v511 = vadd.f32 %v491, %v510
    %512 = vdwg.mxu0
    %513 = vst [vmem:[#allocation7] sm:$0xff] %v511
    // Predicated region
    $region34: #{tpu_custom_call.1} parent=1 // pred_check
      _
    $region35: #{tpu_custom_call.1} parent=1 // pred_check_branch
      %515 = sbr.rel (0) target = $region37
    $region36: #{tpu_custom_call.1} parent=1 // pred_region
      %517 = vsyncadd [#allocation4], 0
      %s519 = sshll.u32 [#allocation7], 4
      %s520 = int_to_ptr.vmem [resolvable:$true] %s519
      %s521 = sshll.u32 %s6, 4
      %s522 = int_to_ptr.hbm [resolvable:$true] %s521
      %524 = dma.vmem_to_hbm [thread:$0]  %s520, 128, %s522, [#allocation4]
    $region37: #{tpu_custom_call.1} parent=1 // pred_fallthru
      _
    // Predicated region
    $region38: #{tpu_custom_call.1} parent=1 // pred_check
      _
    $region39: #{tpu_custom_call.1} parent=1 // pred_check_branch
      %526 = sbr.rel (0) target = $region41
    $region40: #{tpu_custom_call.1} parent=1 // pred_region
      %528 = dma.done [#allocation4], 128
    $region41: #{tpu_custom_call.1} parent=1 // pred_fallthru
      _
    %529 = vsyncpa [#allocation3], 1
    %530 = vsyncpa [#allocation6], 1
    %531 = vsyncpa [#allocation4], 1

</llo_original>
